<compile_context>
chip_gen: v6e
topology: v6e:2x2x1
jax: 0.10.0
libtpu: 0.0.40
codegen_flags: <defaults>
</compile_context>

<pallas_src>
import jax
import jax.numpy as jnp
from jax.experimental import pallas as pl
from jax.experimental.pallas import tpu as pltpu


_DEFAULT_VMEM_LIMIT = 48 << 20   # conservative across v5e/v6e (128 MiB) and v7x (64 MiB/TC)
_PSI_PAD = 1e30                  # padded columns: s = psi_eff - xy ~ +1e30, never the min


def _ot_rowmin_kernel_single(x_ref, y_ref, psi_eff_ref, o_ref):
    """Whole (padded) target set resident in one block: no running-min scratch."""
    # x . y^T on the MXU, f32 accumulation (contract the feature dim).
    xy = jax.lax.dot_general(
        x_ref[...], y_ref[...], (((1,), (1,)), ((), ())),
        preferred_element_type=jnp.float32,
    )                                        # (bn, bm)
    s = psi_eff_ref[...] - xy                # psi_eff = 0.5*||y||^2 - psi (host-folded)
    o_ref[...] = jnp.min(s, axis=1, keepdims=True).astype(o_ref.dtype)


def _ot_rowmin_kernel_multi(x_ref, y_ref, psi_eff_ref, o_ref, acc_ref):
    """General blocked path: elementwise running min across M blocks."""
    j = pl.program_id(1)

    xy = jax.lax.dot_general(
        x_ref[...], y_ref[...], (((1,), (1,)), ((), ())),
        preferred_element_type=jnp.float32,
    )                                        # (bn, bm)
    s = psi_eff_ref[...] - xy

    @pl.when(j == 0)
    def _first():
        # Write s directly: saves the +inf fill store and one full-tile load.
        acc_ref[...] = s

    @pl.when(j > 0)
    def _rest():
        acc_ref[...] = jnp.minimum(acc_ref[...], s)   # VPU only, no XLU

    @pl.when(j == pl.num_programs(1) - 1)
    def _finalize():
        # Single cross-lane reduce per N block.
        o_ref[...] = jnp.min(acc_ref[...], axis=1, keepdims=True).astype(o_ref.dtype)


def _round_up(a, b):
    return ((a + b - 1) // b) * b


def _choose_blocks(N, M, D, budget_bytes):
    """Pick (bn, bm) from a VMEM budget.

    Prefer covering all of M in one block (y/psi streamed from HBM exactly
    once, grid collapses to (N/bn,)), and keep >= 2 N blocks so the 'parallel'
    axis can shard across v7x's two TensorCores.
    """
    m_full = _round_up(M, 128)
    bm = m_full if m_full <= 4096 else 2048

    if N >= 16:
        bn = max(8, _round_up((N + 1) // 2, 8))   # >= 2 N blocks
    else:
        bn = max(8, _round_up(N, 8))
    bn = min(bn, 1024)

    def vmem_need(bn_, bm_):
        return (2 * (bn_ + bm_) * D * 4          # double-buffered x, y tiles
                + 2 * bm_ * 4                    # double-buffered psi_eff tile
                + bn_ * bm_ * 4                  # running-min scratch
                + 2 * bn_ * 4)                   # output tile

    while vmem_need(bn, bm) > budget_bytes:
        if bm > 1024:
            bm = max(128, _round_up(bm // 2, 128))
        elif bn > 256:
            bn = max(8, _round_up(bn // 2, 8))
        elif bm > 128:
            bm = max(128, _round_up(bm // 2, 128))
        elif bn > 8:
            bn = max(8, _round_up(bn // 2, 8))
        else:
            break
    return bn, bm


def semi_dual_ot_loss(x, y, psi, *, block_n=None, block_m=None,
                      vmem_limit_bytes=_DEFAULT_VMEM_LIMIT):
    """JAX/Pallas equivalent of SemiDualOptimalTransportLayer.forward.

    x:   (N, D) inputDataX
    y:   (M, D) targetDataY
    psi: (M,)   dualVariablePsi
    Returns the scalar loss.
    """
    N, D = x.shape
    M, Dy = y.shape
    assert Dy == D, "inputDataX and targetDataY must share the feature dim"
    assert psi.shape == (M,)

    budget = int(0.7 * vmem_limit_bytes)
    bn_auto, bm_auto = _choose_blocks(N, M, D, budget)
    bn = block_n if block_n is not None else bn_auto
    bm = block_m if block_m is not None else bm_auto

    n_pad = _round_up(N, bn)
    m_pad = _round_up(M, bm)

    x_p = x if n_pad == N else jnp.pad(x, ((0, n_pad - N), (0, 0)))
    y_p = y if m_pad == M else jnp.pad(y, ((0, m_pad - M), (0, 0)))

    # Fold 0.5*||y_j||^2 into the dual variable once on the host:
    #   s[i, j] = psi_eff[j] - x_i . y_j,   psi_eff[j] = 0.5*||y_j||^2 - psi[j]
    # Padded columns get +1e30 (sign flipped relative to padding psi) so they
    # never win the row-min.
    psi_eff = (0.5 * jnp.sum(y.astype(jnp.float32) ** 2, axis=1)
               - psi.astype(jnp.float32))
    psi_eff_row = jnp.pad(psi_eff[None, :], ((0, 0), (0, m_pad - M)),
                          constant_values=_PSI_PAD)

    n_blocks = n_pad // bn
    m_blocks = m_pad // bm

    if m_blocks == 1:
        grid = (n_blocks,)
        in_specs = [
            pl.BlockSpec((bn, D), lambda i: (i, 0)),   # x rows
            pl.BlockSpec((bm, D), lambda i: (0, 0)),   # all of y (loaded once)
            pl.BlockSpec((1, bm), lambda i: (0, 0)),   # psi_eff (loaded once)
        ]
        out_specs = pl.BlockSpec((bn, 1), lambda i: (i, 0))
        scratch = []
        kernel = _ot_rowmin_kernel_single
        dim_sem = ("parallel",)
    else:
        grid = (n_blocks, m_blocks)
        in_specs = [
            pl.BlockSpec((bn, D), lambda i, j: (i, 0)),   # x rows
            pl.BlockSpec((bm, D), lambda i, j: (j, 0)),   # y rows
            pl.BlockSpec((1, bm), lambda i, j: (0, j)),   # psi_eff
        ]
        out_specs = pl.BlockSpec((bn, 1), lambda i, j: (i, 0))
        scratch = [pltpu.VMEM((bn, bm), jnp.float32)]
        kernel = _ot_rowmin_kernel_multi
        dim_sem = ("parallel", "arbitrary")

    row_min = pl.pallas_call(
        kernel,
        out_shape=jax.ShapeDtypeStruct((n_pad, 1), jnp.float32),
        grid_spec=pltpu.PrefetchScalarGridSpec(
            num_scalar_prefetch=0,
            grid=grid,
            in_specs=in_specs,
            out_specs=out_specs,
            scratch_shapes=scratch,
        ),
        compiler_params=pltpu.CompilerParams(
            dimension_semantics=dim_sem,
            vmem_limit_bytes=vmem_limit_bytes,
        ),
    )(x_p, y_p, psi_eff_row)

    # 0.5*||x_i||^2 is a per-row constant: add it outside the kernel.
    x_sq_half = 0.5 * jnp.sum(x.astype(jnp.float32) ** 2, axis=1)        # (N,)
    loss = (jnp.sum(row_min[:N, 0] + x_sq_half) / N
            + jnp.mean(psi.astype(jnp.float32)))
    return loss


class SemiDualOptimalTransportLayer:
    """Mirror of the PyTorch module: holds targetDataY and dualVariablePsi."""

    def __init__(self, target_y):
        self.target_y = target_y
        self.num_target = target_y.shape[0]
        # nn.Parameter(torch.zeros(M)) equivalent initial value.
        self.psi = jnp.zeros((self.num_target,), dtype=jnp.float32)

    def __call__(self, x):
        return semi_dual_ot_loss(x, self.target_y, self.psi)


def _reference(x, y, psi):
    """Pure-JAX reference reproducing the PyTorch forward exactly."""
    x = x.astype(jnp.float32)
    y = y.astype(jnp.float32)
    psi = psi.astype(jnp.float32)
    cost = (jnp.sum(x ** 2, axis=1, keepdims=True)
            + jnp.sum(y ** 2, axis=1)[None, :]
            - 2.0 * (x @ y.T)) / 2.0
    loss = jnp.sum(jnp.min(cost - psi[None, :], axis=1))
    return loss / x.shape[0] + jnp.mean(psi)


if __name__ == "__main__":
    key = jax.random.PRNGKey(0)
    k_x, k_y, k_psi, k_x2, k_y2 = jax.random.split(key, 5)

    # Small shapes consistent with the module: N inputs, M targets, D features.
    N, M, D = 256, 512, 32
    x = jax.random.normal(k_x, (N, D), dtype=jnp.float32)
    y = jax.random.normal(k_y, (M, D), dtype=jnp.float32)

    # Module-style forward (psi initialized to zeros, as in __init__).
    layer = SemiDualOptimalTransportLayer(y)
    loss0 = jax.block_until_ready(layer(x))
    ref0 = _reference(x, y, layer.psi)
    assert jnp.isfinite(loss0)
    assert jnp.allclose(loss0, ref0, rtol=1e-4, atol=1e-4), (loss0, ref0)

    # Nonzero psi (the dual variable is a trained parameter).
    psi = jax.random.normal(k_psi, (M,), dtype=jnp.float32)
    loss1 = jax.block_until_ready(semi_dual_ot_loss(x, y, psi))
    ref1 = _reference(x, y, psi)
    assert jnp.allclose(loss1, ref1, rtol=1e-4, atol=1e-4), (loss1, ref1)

    # Force the multi-M-block (running-min scratch) path.
    loss1b = jax.block_until_ready(
        semi_dual_ot_loss(x, y, psi, block_n=64, block_m=128))
    assert jnp.allclose(loss1b, ref1, rtol=1e-4, atol=1e-4), (loss1b, ref1)

    # Ragged shapes exercise the padding / masked-column path.
    x2 = jax.random.normal(k_x2, (100, 24), dtype=jnp.float32)
    y2 = jax.random.normal(k_y2, (130, 24), dtype=jnp.float32)
    psi2 = jax.random.normal(k_psi, (130,), dtype=jnp.float32)
    loss2 = jax.block_until_ready(semi_dual_ot_loss(x2, y2, psi2))
    ref2 = _reference(x2, y2, psi2)
    assert jnp.allclose(loss2, ref2, rtol=1e-4, atol=1e-4), (loss2, ref2)

    print("KERNEL_OK")
</pallas_src>

<mosaic_0001>
module attributes {stable_mosaic.version = 11 : i64} {
  func.func @_ot_rowmin_kernel_single(%arg0: i32, %arg1: memref<128x32xf32, #tpu.memory_space<vmem>>, %arg2: memref<512x32xf32, #tpu.memory_space<vmem>>, %arg3: memref<1x512xf32, #tpu.memory_space<vmem>>, %arg4: memref<128x1xf32, #tpu.memory_space<vmem>>) attributes {dimension_semantics = [#tpu.dimension_semantics<parallel>], iteration_bounds = array<i64: 2>, scalar_prefetch = 0 : i64, scratch_operands = 0 : i64, tpu.core_type = #tpu.core_type<tc>, window_params = [{transform_indices = @transform_0, window_bounds = array<i64: 128, 32>}, {pipeline_mode = #tpu.pipeline_mode<synchronous>, transform_indices = @transform_1, window_bounds = array<i64: 512, 32>}, {pipeline_mode = #tpu.pipeline_mode<synchronous>, transform_indices = @transform_2, window_bounds = array<i64: 1, 512>}, {transform_indices = @transform_3, window_bounds = array<i64: 128, 1>}]} {
    %c0 = arith.constant 0 : index
    %c0_0 = arith.constant 0 : index
    %0 = vector.load %arg1[%c0, %c0_0] : memref<128x32xf32, #tpu.memory_space<vmem>>, vector<128x32xf32>
    %c0_1 = arith.constant 0 : index
    %c0_2 = arith.constant 0 : index
    %1 = vector.load %arg2[%c0_1, %c0_2] : memref<512x32xf32, #tpu.memory_space<vmem>>, vector<512x32xf32>
    %cst = arith.constant dense<0.000000e+00> : vector<128x512xf32>
    %2 = tpu.matmul %0, %1, %cst {dimension_numbers = #tpu.dot_dimension_numbers<[1], [1], [0], [0], [0, 0, 1, 0], [], []>} : vector<128x32xf32>, vector<512x32xf32>, vector<128x512xf32> -> vector<128x512xf32>
    %c0_3 = arith.constant 0 : index
    %c0_4 = arith.constant 0 : index
    %3 = vector.load %arg3[%c0_3, %c0_4] : memref<1x512xf32, #tpu.memory_space<vmem>>, vector<1x512xf32>
    %4 = vector.broadcast %3 : vector<1x512xf32> to vector<128x512xf32>
    %5 = arith.subf %4, %2 : vector<128x512xf32>
    %cst_5 = arith.constant dense<0x7F800000> : vector<128xf32>
    %6 = vector.multi_reduction <minimumf>, %5, %cst_5 [1] : vector<128x512xf32> to vector<128xf32>
    %7 = vector.shape_cast %6 : vector<128xf32> to vector<128x1xf32>
    %c0_6 = arith.constant 0 : index
    %c0_7 = arith.constant 0 : index
    %8 = vector.load %arg4[%c0_6, %c0_7] : memref<128x1xf32, #tpu.memory_space<vmem>>, vector<128x1xf32>
    tpu.vector_store %arg4[%c0_6, %c0_7], %7 {strides = array<i32>} : memref<128x1xf32, #tpu.memory_space<vmem>>, vector<128x1xf32>,
    return
  }
  func.func @transform_0(%arg0: i32) -> (i32, i32) {
    %c0_i32 = arith.constant 0 : i32
    %c0_i32_0 = arith.constant 0 : i32
    return %arg0, %c0_i32 : i32, i32
  }
  func.func @transform_1(%arg0: i32) -> (i32, i32) {
    %c0_i32 = arith.constant 0 : i32
    %c0_i32_0 = arith.constant 0 : i32
    %c0_i32_1 = arith.constant 0 : i32
    return %c0_i32, %c0_i32_0 : i32, i32
  }
  func.func @transform_2(%arg0: i32) -> (i32, i32) {
    %c0_i32 = arith.constant 0 : i32
    %c0_i32_0 = arith.constant 0 : i32
    %c0_i32_1 = arith.constant 0 : i32
    return %c0_i32, %c0_i32_0 : i32, i32
  }
  func.func @transform_3(%arg0: i32) -> (i32, i32) {
    %c0_i32 = arith.constant 0 : i32
    %c0_i32_0 = arith.constant 0 : i32
    return %arg0, %c0_i32 : i32, i32
  }
}

</mosaic_0001>

<llo_original>
// kernel: tpu_custom_call.1
$region0: #{tpu_custom_call.1}
  #allocation0 [shape = 'u32[]', space=smem, size = 0x4, offset = 0x4, fixed_abs, tag = 'smem constant byte address 0x4 - core index']
  #allocation1 [shape = 'u32[144,128]{1,0:T(1,128)}', space=vmem, size = 0x12000, scoped, tag = 'internal scratch']
  %s0 = inlined_call_operand.vmem [shape: f32[256,32], index: 0, kind: input, shape index: {}]
  %s1 = inlined_call_operand.vmem [shape: f32[512,32], index: 1, kind: input, shape index: {}]
  %s2 = inlined_call_operand.vmem [shape: f32[1,512], index: 2, kind: input, shape index: {}]
  %s3 = inlined_call_operand.vmem [shape: f32[256,1], index: 3, kind: output, shape index: {}]
  %s4 = sld [smem:[#allocation0]]
  $region45: #{tpu_custom_call.1} parent=0
    _
  %s6 = ssub.s32 1, %s4
  %s7 = scalar_select 0, %s6, %s4
  loop: start=0, step=1, limit=4
  $region2: #{tpu_custom_call.1} parent=0 // loop_pre_header
    _
  $region3: #{tpu_custom_call.1} parent=0 // loop_header
    %s9 = sphi 0, %s13
    %p10 = scmp.ge.s32.totalorder %s9, 4
    %s19 = sphi 0, %s21
    %s22 = sphi 0, %s19
    %s23 = sphi 0, %s22
    %s39 = sphi 0, %s23
    %s43 = sphi 0, %s43
    %s45 = sphi 0, %s43
    %s46 = sphi 0, %s45
    %s60 = sphi 0, %s46
    %s64 = sphi 0, %s64
    %s66 = sphi 0, %s64
    %s67 = sphi 0, %s66
    %s81 = sphi 0, %s67
    %s87 = sphi 0, %s89
    %s90 = sphi 0, %s87
    %s91 = sphi 0, %s90
    %s107 = sphi 0, %s91
  $region4: #{tpu_custom_call.1} parent=0 // loop_header_branch
    %12 = sbr.rel (%p10) target = $region8
  $region5: #{tpu_custom_call.1} parent=0 // loop_body
    %s14 = ssub.s32 %s9, 1
    %s15 = ssub.s32 %s9, 2
    %s16 = sadd.s32 %s9, 1
    %s17 = ssub.s32 %s9, %s16
    %p18 = scmp.eq.s32.totalorder %s17, 0
    %s20 = sadd.s32 %s19, 1
    %s21 = scalar_select %p18, %s19, %s20
    %p24 = pneg %p18
    %p25 = scmp.eq.s32.totalorder %s9, 1
    %p26 = por %p24, %p25
    %p27 = scmp.ne.s32.totalorder %s19, %s22
    %p28 = scmp.eq.s32.totalorder %s9, 0
    %p29 = por %p27, %p28
    %p30 = scmp.ne.s32.totalorder %s19, %s22
    %p31 = scmp.eq.s32.totalorder %s14, 1
    %p32 = por %p30, %p31
    %p33 = scmp.ne.s32.totalorder %s22, %s23
    %p34 = scmp.eq.s32.totalorder %s14, 0
    %p35 = por %p33, %p34
    %p36 = scmp.ne.s32.totalorder %s22, %s23
    %p37 = scmp.eq.s32.totalorder %s15, 1
    %p38 = por %p36, %p37
    %p40 = scmp.ne.s32.totalorder %s23, %s39
    %p41 = scmp.eq.s32.totalorder %s15, 0
    %p42 = por %p40, %p41
    %s44 = sadd.s32 %s43, 1
    %p47 = scmp.eq.s32.totalorder %s9, 1
    %p48 = scmp.ne.s32.totalorder %s43, %s45
    %p49 = scmp.eq.s32.totalorder %s9, 0
    %p50 = por %p48, %p49
    %p51 = scmp.ne.s32.totalorder %s43, %s45
    %p52 = scmp.eq.s32.totalorder %s14, 1
    %p53 = por %p51, %p52
    %p54 = scmp.ne.s32.totalorder %s45, %s46
    %p55 = scmp.eq.s32.totalorder %s14, 0
    %p56 = por %p54, %p55
    %p57 = scmp.ne.s32.totalorder %s45, %s46
    %p58 = scmp.eq.s32.totalorder %s15, 1
    %p59 = por %p57, %p58
    %p61 = scmp.ne.s32.totalorder %s46, %s60
    %p62 = scmp.eq.s32.totalorder %s15, 0
    %p63 = por %p61, %p62
    %s65 = sadd.s32 %s64, 1
    %p68 = scmp.eq.s32.totalorder %s9, 1
    %p69 = scmp.ne.s32.totalorder %s64, %s66
    %p70 = scmp.eq.s32.totalorder %s9, 0
    %p71 = por %p69, %p70
    %p72 = scmp.ne.s32.totalorder %s64, %s66
    %p73 = scmp.eq.s32.totalorder %s14, 1
    %p74 = por %p72, %p73
    %p75 = scmp.ne.s32.totalorder %s66, %s67
    %p76 = scmp.eq.s32.totalorder %s14, 0
    %p77 = por %p75, %p76
    %p78 = scmp.ne.s32.totalorder %s66, %s67
    %p79 = scmp.eq.s32.totalorder %s15, 1
    %p80 = por %p78, %p79
    %p82 = scmp.ne.s32.totalorder %s67, %s81
    %p83 = scmp.eq.s32.totalorder %s15, 0
    %p84 = por %p82, %p83
    %s85 = ssub.s32 %s9, %s16
    %p86 = scmp.eq.s32.totalorder %s85, 0
    %s88 = sadd.s32 %s87, 1
    %s89 = scalar_select %p86, %s87, %s88
    %p92 = pneg %p86
    %p93 = scmp.eq.s32.totalorder %s9, 1
    %p94 = por %p92, %p93
    %p95 = scmp.ne.s32.totalorder %s87, %s90
    %p96 = scmp.eq.s32.totalorder %s9, 0
    %p97 = por %p95, %p96
    %p98 = scmp.ne.s32.totalorder %s87, %s90
    %p99 = scmp.eq.s32.totalorder %s14, 1
    %p100 = por %p98, %p99
    %p101 = scmp.ne.s32.totalorder %s90, %s91
    %p102 = scmp.eq.s32.totalorder %s14, 0
    %p103 = por %p101, %p102
    %p104 = scmp.ne.s32.totalorder %s90, %s91
    %p105 = scmp.eq.s32.totalorder %s15, 1
    %p106 = por %p104, %p105
    %p108 = scmp.ne.s32.totalorder %s91, %s107
    %p109 = scmp.eq.s32.totalorder %s15, 0
    %p110 = por %p108, %p109
    %p111 = scmp.le.s32.totalorder 1, %s9
    %p112 = scmp.lt.s32.totalorder %s9, 3
    %p113 = pnand %p111, %p112
    %p114 = pneg %p113
    // Predicated region
    $region9: #{tpu_custom_call.1} parent=5 // pred_check
      _
    $region10: #{tpu_custom_call.1} parent=5 // pred_check_branch
      %116 = sbr.rel (%p113) target = $region12
    $region11: #{tpu_custom_call.1} parent=5 // pred_region
      %s117 = ssub.s32 %s9, 1
      // Predicated region
      $region13: #{tpu_custom_call.1} parent=11 // pred_check
        %p118 = pneg %p56
      $region14: #{tpu_custom_call.1} parent=11 // pred_check_branch
        %120 = sbr.rel (%p118) target = $region16
      $region15: #{tpu_custom_call.1} parent=11 // pred_region
        _
      $region16: #{tpu_custom_call.1} parent=11 // pred_fallthru
        _
      // Predicated region
      $region17: #{tpu_custom_call.1} parent=11 // pred_check
        %p121 = pneg %p77
      $region18: #{tpu_custom_call.1} parent=11 // pred_check_branch
        %123 = sbr.rel (%p121) target = $region20
      $region19: #{tpu_custom_call.1} parent=11 // pred_region
        _
      $region20: #{tpu_custom_call.1} parent=11 // pred_fallthru
        _
    $region12: #{tpu_custom_call.1} parent=5 // pred_fallthru
      _
    %p124 = scmp.lt.s32.totalorder %s9, 2
    // Predicated region
    $region21: #{tpu_custom_call.1} parent=5 // pred_check
      %p125 = pneg %p124
    $region22: #{tpu_custom_call.1} parent=5 // pred_check_branch
      %127 = sbr.rel (%p125) target = $region24
    $region23: #{tpu_custom_call.1} parent=5 // pred_region
      // Predicated region
      $region25: #{tpu_custom_call.1} parent=23 // pred_check
        %p128 = pneg %p29
      $region26: #{tpu_custom_call.1} parent=23 // pred_check_branch
        %130 = sbr.rel (%p128) target = $region28
      $region27: #{tpu_custom_call.1} parent=23 // pred_region
        %s131 = smul.u32 16, %s9
        %p132 = scmp.lt.s32.totalorder %s131, 31
        %s133 = scalar_select %p132, %s131, 31
        %s134 = smul.addr %s133, 8
        %s135 = scalar_lea.vmem %s0, %s134
        %s136 = smul.u32 16, %s9
      $region28: #{tpu_custom_call.1} parent=23 // pred_fallthru
        _
    $region24: #{tpu_custom_call.1} parent=5 // pred_fallthru
      _
    %p137 = scmp.le.s32.totalorder 1, %s9
    %p138 = scmp.lt.s32.totalorder %s9, 3
    %p139 = pnand %p137, %p138
    %p140 = pneg %p139
    // Predicated region
    $region29: #{tpu_custom_call.1} parent=5 // pred_check
      _
    $region30: #{tpu_custom_call.1} parent=5 // pred_check_branch
      %142 = sbr.rel (%p139) target = $region32
    $region31: #{tpu_custom_call.1} parent=5 // pred_region
      %s143 = ssub.s32 %s9, 1
      %s144 = smul.u32 16, %s14
      %p145 = scmp.lt.s32.totalorder %s144, 31
      %s146 = scalar_select %p145, %s144, 31
      %s147 = smul.addr %s146, 8
      %s148 = scalar_lea.vmem %s0, %s147
      %p149 = pneg %p35
      %p150 = pneg %p32
      %p151 = pneg %p56
      %p152 = pneg %p53
      %p153 = pneg %p77
      %p154 = pneg %p74
      %p155 = pneg %p103
      %p156 = pneg %p100
      %s157 = smul.u32 16, %s14
      %p158 = scmp.lt.s32.totalorder %s157, 31
      %s159 = scalar_select %p158, %s157, 31
      %s160 = smul.addr %s159, 8
      %s161 = scalar_lea.vmem %s3, %s160
      %s162 = smul.u32 16, %s14
      %p163 = scmp.lt.s32.totalorder %s162, 31
      %s164 = scalar_select %p163, %s162, 31
      %s165 = smul.addr %s164, 8
      %s166 = scalar_lea.vmem %s0, %s165
      %s167 = smul.u32 16, %s14
      %s168 = smul.u32 16, %s14
      %p169 = scmp.lt.s32.totalorder %s168, 31
      %s170 = scalar_select %p169, %s168, 31
      %s171 = smul.addr %s170, 8
      %s172 = scalar_lea.vmem %s3, %s171
      %s173 = smul.u32 16, %s14
      %v174 = vld [vmem:[%s166] sm:$0xff]
      %v175 = vld [vmem:[%s166 + $0x8] sm:$0xff]
      %v176 = vld [vmem:[%s166 + $0x10] sm:$0xff]
      %v177 = vld [vmem:[%s166 + $0x18] sm:$0xff]
      %v178 = vld [vmem:[%s166 + $0x20] sm:$0xff]
      %v179 = vld [vmem:[%s166 + $0x28] sm:$0xff]
      %v180 = vld [vmem:[%s166 + $0x30] sm:$0xff]
      %v181 = vld [vmem:[%s166 + $0x38] sm:$0xff]
      %v182 = vld [vmem:[%s166 + $0x40] sm:$0xff]
      %v183 = vld [vmem:[%s166 + $0x48] sm:$0xff]
      %v184 = vld [vmem:[%s166 + $0x50] sm:$0xff]
      %v185 = vld [vmem:[%s166 + $0x58] sm:$0xff]
      %v186 = vld [vmem:[%s166 + $0x60] sm:$0xff]
      %v187 = vld [vmem:[%s166 + $0x68] sm:$0xff]
      %v188 = vld [vmem:[%s166 + $0x70] sm:$0xff]
      %v189 = vld [vmem:[%s166 + $0x78] sm:$0xff]
      %v190 = vld [vmem:[%s1] sm:$0xff]
      %v191 = vld [vmem:[%s1 + $0x8] sm:$0xff]
      %v192 = vld [vmem:[%s1 + $0x10] sm:$0xff]
      %v193 = vld [vmem:[%s1 + $0x18] sm:$0xff]
      %v194 = vld [vmem:[%s1 + $0x20] sm:$0xff]
      %v195 = vld [vmem:[%s1 + $0x28] sm:$0xff]
      %v196 = vld [vmem:[%s1 + $0x30] sm:$0xff]
      %v197 = vld [vmem:[%s1 + $0x38] sm:$0xff]
      %v198 = vld [vmem:[%s1 + $0x40] sm:$0xff]
      %v199 = vld [vmem:[%s1 + $0x48] sm:$0xff]
      %v200 = vld [vmem:[%s1 + $0x50] sm:$0xff]
      %v201 = vld [vmem:[%s1 + $0x58] sm:$0xff]
      %v202 = vld [vmem:[%s1 + $0x60] sm:$0xff]
      %v203 = vld [vmem:[%s1 + $0x68] sm:$0xff]
      %v204 = vld [vmem:[%s1 + $0x70] sm:$0xff]
      %v205 = vld [vmem:[%s1 + $0x78] sm:$0xff]
      %v206 = vld [vmem:[%s1 + $0x80] sm:$0xff]
      %v207 = vld [vmem:[%s1 + $0x88] sm:$0xff]
      %v208 = vld [vmem:[%s1 + $0x90] sm:$0xff]
      %v209 = vld [vmem:[%s1 + $0x98] sm:$0xff]
      %v210 = vld [vmem:[%s1 + $0xa0] sm:$0xff]
      %v211 = vld [vmem:[%s1 + $0xa8] sm:$0xff]
      %v212 = vld [vmem:[%s1 + $0xb0] sm:$0xff]
      %v213 = vld [vmem:[%s1 + $0xb8] sm:$0xff]
      %v214 = vld [vmem:[%s1 + $0xc0] sm:$0xff]
      %v215 = vld [vmem:[%s1 + $0xc8] sm:$0xff]
      %v216 = vld [vmem:[%s1 + $0xd0] sm:$0xff]
      %v217 = vld [vmem:[%s1 + $0xd8] sm:$0xff]
      %v218 = vld [vmem:[%s1 + $0xe0] sm:$0xff]
      %v219 = vld [vmem:[%s1 + $0xe8] sm:$0xff]
      %v220 = vld [vmem:[%s1 + $0xf0] sm:$0xff]
      %v221 = vld [vmem:[%s1 + $0xf8] sm:$0xff]
      %v222 = vld [vmem:[%s1 + $0x100] sm:$0xff]
      %v223 = vld [vmem:[%s1 + $0x108] sm:$0xff]
      %v224 = vld [vmem:[%s1 + $0x110] sm:$0xff]
      %v225 = vld [vmem:[%s1 + $0x118] sm:$0xff]
      %v226 = vld [vmem:[%s1 + $0x120] sm:$0xff]
      %v227 = vld [vmem:[%s1 + $0x128] sm:$0xff]
      %v228 = vld [vmem:[%s1 + $0x130] sm:$0xff]
      %v229 = vld [vmem:[%s1 + $0x138] sm:$0xff]
      %v230 = vld [vmem:[%s1 + $0x140] sm:$0xff]
      %v231 = vld [vmem:[%s1 + $0x148] sm:$0xff]
      %v232 = vld [vmem:[%s1 + $0x150] sm:$0xff]
      %v233 = vld [vmem:[%s1 + $0x158] sm:$0xff]
      %v234 = vld [vmem:[%s1 + $0x160] sm:$0xff]
      %v235 = vld [vmem:[%s1 + $0x168] sm:$0xff]
      %v236 = vld [vmem:[%s1 + $0x170] sm:$0xff]
      %v237 = vld [vmem:[%s1 + $0x178] sm:$0xff]
      %v238 = vld [vmem:[%s1 + $0x180] sm:$0xff]
      %v239 = vld [vmem:[%s1 + $0x188] sm:$0xff]
      %v240 = vld [vmem:[%s1 + $0x190] sm:$0xff]
      %v241 = vld [vmem:[%s1 + $0x198] sm:$0xff]
      %v242 = vld [vmem:[%s1 + $0x1a0] sm:$0xff]
      %v243 = vld [vmem:[%s1 + $0x1a8] sm:$0xff]
      %v244 = vld [vmem:[%s1 + $0x1b0] sm:$0xff]
      %v245 = vld [vmem:[%s1 + $0x1b8] sm:$0xff]
      %v246 = vld [vmem:[%s1 + $0x1c0] sm:$0xff]
      %v247 = vld [vmem:[%s1 + $0x1c8] sm:$0xff]
      %v248 = vld [vmem:[%s1 + $0x1d0] sm:$0xff]
      %v249 = vld [vmem:[%s1 + $0x1d8] sm:$0xff]
      %v250 = vld [vmem:[%s1 + $0x1e0] sm:$0xff]
      %v251 = vld [vmem:[%s1 + $0x1e8] sm:$0xff]
      %v252 = vld [vmem:[%s1 + $0x1f0] sm:$0xff]
      %v253 = vld [vmem:[%s1 + $0x1f8] sm:$0xff]
      %vm254 = vcmask 261120
      %v256 = vsel %vm254, %v174, 0
      %v259 = vsel %vm254, %v175, 0
      %v262 = vsel %vm254, %v176, 0
      %v265 = vsel %vm254, %v177, 0
      %v268 = vsel %vm254, %v178, 0
      %v271 = vsel %vm254, %v179, 0
      %v274 = vsel %vm254, %v180, 0
      %v277 = vsel %vm254, %v181, 0
      %v280 = vsel %vm254, %v182, 0
      %v283 = vsel %vm254, %v183, 0
      %v286 = vsel %vm254, %v184, 0
      %v289 = vsel %vm254, %v185, 0
      %v292 = vsel %vm254, %v186, 0
      %v295 = vsel %vm254, %v187, 0
      %v298 = vsel %vm254, %v188, 0
      %v301 = vsel %vm254, %v189, 0
      %v304 = vsel %vm254, %v190, 0
      %v307 = vsel %vm254, %v191, 0
      %v310 = vsel %vm254, %v192, 0
      %v313 = vsel %vm254, %v193, 0
      %v316 = vsel %vm254, %v194, 0
      %v319 = vsel %vm254, %v195, 0
      %v322 = vsel %vm254, %v196, 0
      %v325 = vsel %vm254, %v197, 0
      %v328 = vsel %vm254, %v198, 0
      %v331 = vsel %vm254, %v199, 0
      %v334 = vsel %vm254, %v200, 0
      %v337 = vsel %vm254, %v201, 0
      %v340 = vsel %vm254, %v202, 0
      %v343 = vsel %vm254, %v203, 0
      %v346 = vsel %vm254, %v204, 0
      %v349 = vsel %vm254, %v205, 0
      %v352 = vsel %vm254, %v206, 0
      %v355 = vsel %vm254, %v207, 0
      %v358 = vsel %vm254, %v208, 0
      %v361 = vsel %vm254, %v209, 0
      %v364 = vsel %vm254, %v210, 0
      %v367 = vsel %vm254, %v211, 0
      %v370 = vsel %vm254, %v212, 0
      %v373 = vsel %vm254, %v213, 0
      %v376 = vsel %vm254, %v214, 0
      %v379 = vsel %vm254, %v215, 0
      %v382 = vsel %vm254, %v216, 0
      %v385 = vsel %vm254, %v217, 0
      %v388 = vsel %vm254, %v218, 0
      %v391 = vsel %vm254, %v219, 0
      %v394 = vsel %vm254, %v220, 0
      %v397 = vsel %vm254, %v221, 0
      %v400 = vsel %vm254, %v222, 0
      %v403 = vsel %vm254, %v223, 0
      %v406 = vsel %vm254, %v224, 0
      %v409 = vsel %vm254, %v225, 0
      %v412 = vsel %vm254, %v226, 0
      %v415 = vsel %vm254, %v227, 0
      %v418 = vsel %vm254, %v228, 0
      %v421 = vsel %vm254, %v229, 0
      %v424 = vsel %vm254, %v230, 0
      %v427 = vsel %vm254, %v231, 0
      %v430 = vsel %vm254, %v232, 0
      %v433 = vsel %vm254, %v233, 0
      %v436 = vsel %vm254, %v234, 0
      %v439 = vsel %vm254, %v235, 0
      %v442 = vsel %vm254, %v236, 0
      %v445 = vsel %vm254, %v237, 0
      %v448 = vsel %vm254, %v238, 0
      %v451 = vsel %vm254, %v239, 0
      %v454 = vsel %vm254, %v240, 0
      %v457 = vsel %vm254, %v241, 0
      %v460 = vsel %vm254, %v242, 0
      %v463 = vsel %vm254, %v243, 0
      %v466 = vsel %vm254, %v244, 0
      %v469 = vsel %vm254, %v245, 0
      %v472 = vsel %vm254, %v246, 0
      %v475 = vsel %vm254, %v247, 0
      %v478 = vsel %vm254, %v248, 0
      %v481 = vsel %vm254, %v249, 0
      %v484 = vsel %vm254, %v250, 0
      %v487 = vsel %vm254, %v251, 0
      %v490 = vsel %vm254, %v252, 0
      %v493 = vsel %vm254, %v253, 0
      %495 = vmatprep.subr.mxu0 0.0
      %496 = vmatpush1.xpose.msra.mxu0 %v349
      %497 = vmatprep.subr.mxu0 0.0
      %498 = vmatpush1.xpose.msra.mxu0 %v346
      %499 = vmatprep.subr.mxu0 0.0
      %500 = vmatpush1.xpose.msra.mxu0 %v343
      %501 = vmatprep.subr.mxu0 0.0
      %502 = vmatpush1.xpose.msra.mxu0 %v340
      %503 = vmatprep.subr.mxu0 0.0
      %504 = vmatpush1.xpose.msra.mxu0 %v337
      %505 = vmatprep.subr.mxu0 0.0
      %506 = vmatpush1.xpose.msra.mxu0 %v334
      %507 = vmatprep.subr.mxu0 0.0
      %508 = vmatpush1.xpose.msra.mxu0 %v331
      %509 = vmatprep.subr.mxu0 0.0
      %510 = vmatpush1.xpose.msra.mxu0 %v328
      %511 = vmatprep.subr.mxu0 0.0
      %512 = vmatpush1.xpose.msra.mxu0 %v325
      %513 = vmatprep.subr.mxu0 0.0
      %514 = vmatpush1.xpose.msra.mxu0 %v322
      %515 = vmatprep.subr.mxu0 0.0
      %516 = vmatpush1.xpose.msra.mxu0 %v319
      %517 = vmatprep.subr.mxu0 0.0
      %518 = vmatpush1.xpose.msra.mxu0 %v316
      %519 = vmatprep.subr.mxu0 0.0
      %520 = vmatpush1.xpose.msra.mxu0 %v313
      %521 = vmatprep.subr.mxu0 0.0
      %522 = vmatpush1.xpose.msra.mxu0 %v310
      %523 = vmatprep.subr.mxu0 0.0
      %524 = vmatpush1.xpose.msra.mxu0 %v307
      %525 = vmatprep.subr.mxu0 0.0
      %526 = vmatpush1.xpose.msra.mxu0 %v304
      %527 = vmatprep.subr.mxu0 0.0
      %528 = vmatpush2.xpose.msra.mxu0 %v397
      %529 = vmatprep.subr.mxu0 0.0
      %530 = vmatpush2.xpose.msra.mxu0 %v394
      %531 = vmatprep.subr.mxu0 0.0
      %532 = vmatpush2.xpose.msra.mxu0 %v391
      %533 = vmatprep.subr.mxu0 0.0
      %534 = vmatpush2.xpose.msra.mxu0 %v388
      %535 = vmatprep.subr.mxu0 0.0
      %536 = vmatpush2.xpose.msra.mxu0 %v385
      %537 = vmatprep.subr.mxu0 0.0
      %538 = vmatpush2.xpose.msra.mxu0 %v382
      %539 = vmatprep.subr.mxu0 0.0
      %540 = vmatpush2.xpose.msra.mxu0 %v379
      %541 = vmatprep.subr.mxu0 0.0
      %542 = vmatpush2.xpose.msra.mxu0 %v376
      %543 = vmatprep.subr.mxu0 0.0
      %544 = vmatpush2.xpose.msra.mxu0 %v373
      %545 = vmatprep.subr.mxu0 0.0
      %546 = vmatpush2.xpose.msra.mxu0 %v370
      %547 = vmatprep.subr.mxu0 0.0
      %548 = vmatpush2.xpose.msra.mxu0 %v367
      %549 = vmatprep.subr.mxu0 0.0
      %550 = vmatpush2.xpose.msra.mxu0 %v364
      %551 = vmatprep.subr.mxu0 0.0
      %552 = vmatpush2.xpose.msra.mxu0 %v361
      %553 = vmatprep.subr.mxu0 0.0
      %554 = vmatpush2.xpose.msra.mxu0 %v358
      %555 = vmatprep.subr.mxu0 0.0
      %556 = vmatpush2.xpose.msra.mxu0 %v355
      %557 = vmatprep.subr.mxu0 0.0
      %558 = vmatpush2.xpose.msra.mxu0 %v352
      %559 = vmatprep.mubr.f32.mxu0 0.0
      %560 = vmatmul.mubr.f32.gmra.mxu0 %v256
      %v561 = vpop.f32.mrf.mxu0
      %v562 = vadd.f32 0.0, %v561
      %v563 = vpop.f32.mrf.mxu0
      %v564 = vadd.f32 0.0, %v563
      %565 = vmatprep.mubr.f32.mxu0 0.0
      %566 = vmatmul.mubr.f32.gmra.mxu0 %v259
      %v567 = vpop.f32.mrf.mxu0
      %v568 = vadd.f32 0.0, %v567
      %v569 = vpop.f32.mrf.mxu0
      %v570 = vadd.f32 0.0, %v569
      %571 = vmatprep.mubr.f32.mxu0 0.0
      %572 = vmatmul.mubr.f32.gmra.mxu0 %v262
      %v573 = vpop.f32.mrf.mxu0
      %v574 = vadd.f32 0.0, %v573
      %v575 = vpop.f32.mrf.mxu0
      %v576 = vadd.f32 0.0, %v575
      %577 = vmatprep.mubr.f32.mxu0 0.0
      %578 = vmatmul.mubr.f32.gmra.mxu0 %v265
      %v579 = vpop.f32.mrf.mxu0
      %v580 = vadd.f32 0.0, %v579
      %v581 = vpop.f32.mrf.mxu0
      %v582 = vadd.f32 0.0, %v581
      %583 = vmatprep.mubr.f32.mxu0 0.0
      %584 = vmatmul.mubr.f32.gmra.mxu0 %v268
      %v585 = vpop.f32.mrf.mxu0
      %v586 = vadd.f32 0.0, %v585
      %v587 = vpop.f32.mrf.mxu0
      %v588 = vadd.f32 0.0, %v587
      %589 = vmatprep.mubr.f32.mxu0 0.0
      %590 = vmatmul.mubr.f32.gmra.mxu0 %v271
      %v591 = vpop.f32.mrf.mxu0
      %v592 = vadd.f32 0.0, %v591
      %v593 = vpop.f32.mrf.mxu0
      %v594 = vadd.f32 0.0, %v593
      %595 = vmatprep.mubr.f32.mxu0 0.0
      %596 = vmatmul.mubr.f32.gmra.mxu0 %v274
      %v597 = vpop.f32.mrf.mxu0
      %v598 = vadd.f32 0.0, %v597
      %v599 = vpop.f32.mrf.mxu0
      %v600 = vadd.f32 0.0, %v599
      %601 = vmatprep.mubr.f32.mxu0 0.0
      %602 = vmatmul.mubr.f32.gmra.mxu0 %v277
      %v603 = vpop.f32.mrf.mxu0
      %v604 = vadd.f32 0.0, %v603
      %v605 = vpop.f32.mrf.mxu0
      %v606 = vadd.f32 0.0, %v605
      %607 = vmatprep.mubr.f32.mxu0 0.0
      %608 = vmatmul.mubr.f32.gmra.mxu0 %v280
      %v609 = vpop.f32.mrf.mxu0
      %v610 = vadd.f32 0.0, %v609
      %v611 = vpop.f32.mrf.mxu0
      %v612 = vadd.f32 0.0, %v611
      %613 = vmatprep.mubr.f32.mxu0 0.0
      %614 = vmatmul.mubr.f32.gmra.mxu0 %v283
      %v615 = vpop.f32.mrf.mxu0
      %v616 = vadd.f32 0.0, %v615
      %v617 = vpop.f32.mrf.mxu0
      %v618 = vadd.f32 0.0, %v617
      %619 = vmatprep.mubr.f32.mxu0 0.0
      %620 = vmatmul.mubr.f32.gmra.mxu0 %v286
      %v621 = vpop.f32.mrf.mxu0
      %v622 = vadd.f32 0.0, %v621
      %v623 = vpop.f32.mrf.mxu0
      %v624 = vadd.f32 0.0, %v623
      %625 = vmatprep.mubr.f32.mxu0 0.0
      %626 = vmatmul.mubr.f32.gmra.mxu0 %v289
      %v627 = vpop.f32.mrf.mxu0
      %v628 = vadd.f32 0.0, %v627
      %v629 = vpop.f32.mrf.mxu0
      %v630 = vadd.f32 0.0, %v629
      %631 = vmatprep.mubr.f32.mxu0 0.0
      %632 = vmatmul.mubr.f32.gmra.mxu0 %v292
      %v633 = vpop.f32.mrf.mxu0
      %v634 = vadd.f32 0.0, %v633
      %v635 = vpop.f32.mrf.mxu0
      %v636 = vadd.f32 0.0, %v635
      %637 = vmatprep.mubr.f32.mxu0 0.0
      %638 = vmatmul.mubr.f32.gmra.mxu0 %v295
      %v639 = vpop.f32.mrf.mxu0
      %v640 = vadd.f32 0.0, %v639
      %v641 = vpop.f32.mrf.mxu0
      %v642 = vadd.f32 0.0, %v641
      %643 = vmatprep.mubr.f32.mxu0 0.0
      %644 = vmatmul.mubr.f32.gmra.mxu0 %v298
      %v645 = vpop.f32.mrf.mxu0
      %v646 = vadd.f32 0.0, %v645
      %v647 = vpop.f32.mrf.mxu0
      %v648 = vadd.f32 0.0, %v647
      %649 = vmatprep.mubr.f32.mxu0 0.0
      %650 = vmatmul.mubr.f32.gmra.mxu0 %v301
      %v651 = vpop.f32.mrf.mxu0
      %v652 = vadd.f32 0.0, %v651
      %v653 = vpop.f32.mrf.mxu0
      %v654 = vadd.f32 0.0, %v653
      %655 = vdwg.mxu0
      %656 = vmatprep.subr.mxu0 0.0
      %657 = vmatpush1.xpose.msra.mxu0 %v445
      %658 = vmatprep.subr.mxu0 0.0
      %659 = vmatpush1.xpose.msra.mxu0 %v442
      %660 = vmatprep.subr.mxu0 0.0
      %661 = vmatpush1.xpose.msra.mxu0 %v439
      %662 = vmatprep.subr.mxu0 0.0
      %663 = vmatpush1.xpose.msra.mxu0 %v436
      %664 = vmatprep.subr.mxu0 0.0
      %665 = vmatpush1.xpose.msra.mxu0 %v433
      %666 = vmatprep.subr.mxu0 0.0
      %667 = vmatpush1.xpose.msra.mxu0 %v430
      %668 = vmatprep.subr.mxu0 0.0
      %669 = vmatpush1.xpose.msra.mxu0 %v427
      %670 = vmatprep.subr.mxu0 0.0
      %671 = vmatpush1.xpose.msra.mxu0 %v424
      %672 = vmatprep.subr.mxu0 0.0
      %673 = vmatpush1.xpose.msra.mxu0 %v421
      %674 = vmatprep.subr.mxu0 0.0
      %675 = vmatpush1.xpose.msra.mxu0 %v418
      %676 = vmatprep.subr.mxu0 0.0
      %677 = vmatpush1.xpose.msra.mxu0 %v415
      %678 = vmatprep.subr.mxu0 0.0
      %679 = vmatpush1.xpose.msra.mxu0 %v412
      %680 = vmatprep.subr.mxu0 0.0
      %681 = vmatpush1.xpose.msra.mxu0 %v409
      %682 = vmatprep.subr.mxu0 0.0
      %683 = vmatpush1.xpose.msra.mxu0 %v406
      %684 = vmatprep.subr.mxu0 0.0
      %685 = vmatpush1.xpose.msra.mxu0 %v403
      %686 = vmatprep.subr.mxu0 0.0
      %687 = vmatpush1.xpose.msra.mxu0 %v400
      %688 = vmatprep.subr.mxu0 0.0
      %689 = vmatpush2.xpose.msra.mxu0 %v493
      %690 = vmatprep.subr.mxu0 0.0
      %691 = vmatpush2.xpose.msra.mxu0 %v490
      %692 = vmatprep.subr.mxu0 0.0
      %693 = vmatpush2.xpose.msra.mxu0 %v487
      %694 = vmatprep.subr.mxu0 0.0
      %695 = vmatpush2.xpose.msra.mxu0 %v484
      %696 = vmatprep.subr.mxu0 0.0
      %697 = vmatpush2.xpose.msra.mxu0 %v481
      %698 = vmatprep.subr.mxu0 0.0
      %699 = vmatpush2.xpose.msra.mxu0 %v478
      %700 = vmatprep.subr.mxu0 0.0
      %701 = vmatpush2.xpose.msra.mxu0 %v475
      %702 = vmatprep.subr.mxu0 0.0
      %703 = vmatpush2.xpose.msra.mxu0 %v472
      %704 = vmatprep.subr.mxu0 0.0
      %705 = vmatpush2.xpose.msra.mxu0 %v469
      %706 = vmatprep.subr.mxu0 0.0
      %707 = vmatpush2.xpose.msra.mxu0 %v466
      %708 = vmatprep.subr.mxu0 0.0
      %709 = vmatpush2.xpose.msra.mxu0 %v463
      %710 = vmatprep.subr.mxu0 0.0
      %711 = vmatpush2.xpose.msra.mxu0 %v460
      %712 = vmatprep.subr.mxu0 0.0
      %713 = vmatpush2.xpose.msra.mxu0 %v457
      %714 = vmatprep.subr.mxu0 0.0
      %715 = vmatpush2.xpose.msra.mxu0 %v454
      %716 = vmatprep.subr.mxu0 0.0
      %717 = vmatpush2.xpose.msra.mxu0 %v451
      %718 = vmatprep.subr.mxu0 0.0
      %719 = vmatpush2.xpose.msra.mxu0 %v448
      %720 = vmatprep.mubr.f32.mxu0 0.0
      %721 = vmatmul.mubr.f32.gmra.mxu0 %v256
      %v722 = vpop.f32.mrf.mxu0
      %v723 = vadd.f32 0.0, %v722
      %v724 = vpop.f32.mrf.mxu0
      %v725 = vadd.f32 0.0, %v724
      %726 = vmatprep.mubr.f32.mxu0 0.0
      %727 = vmatmul.mubr.f32.gmra.mxu0 %v259
      %v728 = vpop.f32.mrf.mxu0
      %v729 = vadd.f32 0.0, %v728
      %v730 = vpop.f32.mrf.mxu0
      %v731 = vadd.f32 0.0, %v730
      %732 = vmatprep.mubr.f32.mxu0 0.0
      %733 = vmatmul.mubr.f32.gmra.mxu0 %v262
      %v734 = vpop.f32.mrf.mxu0
      %v735 = vadd.f32 0.0, %v734
      %v736 = vpop.f32.mrf.mxu0
      %v737 = vadd.f32 0.0, %v736
      %738 = vmatprep.mubr.f32.mxu0 0.0
      %739 = vmatmul.mubr.f32.gmra.mxu0 %v265
      %v740 = vpop.f32.mrf.mxu0
      %v741 = vadd.f32 0.0, %v740
      %v742 = vpop.f32.mrf.mxu0
      %v743 = vadd.f32 0.0, %v742
      %744 = vmatprep.mubr.f32.mxu0 0.0
      %745 = vmatmul.mubr.f32.gmra.mxu0 %v268
      %v746 = vpop.f32.mrf.mxu0
      %v747 = vadd.f32 0.0, %v746
      %v748 = vpop.f32.mrf.mxu0
      %v749 = vadd.f32 0.0, %v748
      %750 = vmatprep.mubr.f32.mxu0 0.0
      %751 = vmatmul.mubr.f32.gmra.mxu0 %v271
      %v752 = vpop.f32.mrf.mxu0
      %v753 = vadd.f32 0.0, %v752
      %v754 = vpop.f32.mrf.mxu0
      %v755 = vadd.f32 0.0, %v754
      %756 = vmatprep.mubr.f32.mxu0 0.0
      %757 = vmatmul.mubr.f32.gmra.mxu0 %v274
      %v758 = vpop.f32.mrf.mxu0
      %v759 = vadd.f32 0.0, %v758
      %v760 = vpop.f32.mrf.mxu0
      %v761 = vadd.f32 0.0, %v760
      %762 = vmatprep.mubr.f32.mxu0 0.0
      %763 = vmatmul.mubr.f32.gmra.mxu0 %v277
      %v764 = vpop.f32.mrf.mxu0
      %v765 = vadd.f32 0.0, %v764
      %v766 = vpop.f32.mrf.mxu0
      %v767 = vadd.f32 0.0, %v766
      %768 = vmatprep.mubr.f32.mxu0 0.0
      %769 = vmatmul.mubr.f32.gmra.mxu0 %v280
      %v770 = vpop.f32.mrf.mxu0
      %v771 = vadd.f32 0.0, %v770
      %v772 = vpop.f32.mrf.mxu0
      %v773 = vadd.f32 0.0, %v772
      %774 = vmatprep.mubr.f32.mxu0 0.0
      %775 = vmatmul.mubr.f32.gmra.mxu0 %v283
      %v776 = vpop.f32.mrf.mxu0
      %v777 = vadd.f32 0.0, %v776
      %v778 = vpop.f32.mrf.mxu0
      %v779 = vadd.f32 0.0, %v778
      %780 = vmatprep.mubr.f32.mxu0 0.0
      %781 = vmatmul.mubr.f32.gmra.mxu0 %v286
      %v782 = vpop.f32.mrf.mxu0
      %v783 = vadd.f32 0.0, %v782
      %v784 = vpop.f32.mrf.mxu0
      %v785 = vadd.f32 0.0, %v784
      %786 = vmatprep.mubr.f32.mxu0 0.0
      %787 = vmatmul.mubr.f32.gmra.mxu0 %v289
      %v788 = vpop.f32.mrf.mxu0
      %v789 = vadd.f32 0.0, %v788
      %v790 = vpop.f32.mrf.mxu0
      %v791 = vadd.f32 0.0, %v790
      %792 = vmatprep.mubr.f32.mxu0 0.0
      %793 = vmatmul.mubr.f32.gmra.mxu0 %v292
      %v794 = vpop.f32.mrf.mxu0
      %v795 = vadd.f32 0.0, %v794
      %v796 = vpop.f32.mrf.mxu0
      %v797 = vadd.f32 0.0, %v796
      %798 = vmatprep.mubr.f32.mxu0 0.0
      %799 = vmatmul.mubr.f32.gmra.mxu0 %v295
      %v800 = vpop.f32.mrf.mxu0
      %v801 = vadd.f32 0.0, %v800
      %v802 = vpop.f32.mrf.mxu0
      %v803 = vadd.f32 0.0, %v802
      %804 = vmatprep.mubr.f32.mxu0 0.0
      %805 = vmatmul.mubr.f32.gmra.mxu0 %v298
      %v806 = vpop.f32.mrf.mxu0
      %v807 = vadd.f32 0.0, %v806
      %v808 = vpop.f32.mrf.mxu0
      %v809 = vadd.f32 0.0, %v808
      %810 = vmatprep.mubr.f32.mxu0 0.0
      %811 = vmatmul.mubr.f32.gmra.mxu0 %v301
      %v812 = vpop.f32.mrf.mxu0
      %v813 = vadd.f32 0.0, %v812
      %v814 = vpop.f32.mrf.mxu0
      %v815 = vadd.f32 0.0, %v814
      %816 = vdwg.mxu0
      %v817 = vld [vmem:[%s2] sm:$0xf]
      %v819 = vlaneseq
      %v820 = vshrl.u32 %v819, 7
      %v821 = vsub.s32 0, %v820
      %v822 = vrot.slane %v817, %v821
      %v823 = vlaneseq
      %v824 = vshrl.u32 %v823, 7
      %v825 = vsub.s32 1, %v824
      %v826 = vrot.slane %v817, %v825
      %v827 = vlaneseq
      %v828 = vshrl.u32 %v827, 7
      %v829 = vsub.s32 2, %v828
      %v830 = vrot.slane %v817, %v829
      %v831 = vlaneseq
      %v832 = vshrl.u32 %v831, 7
      %v833 = vsub.s32 3, %v832
      %v834 = vrot.slane %v817, %v833
      %v839 = vsub.f32 %v822, %v562
      %v840 = vsub.f32 %v826, %v564
      %v841 = vsub.f32 %v830, %v723
      %v842 = vsub.f32 %v834, %v725
      %v843 = vsub.f32 %v822, %v568
      %v844 = vsub.f32 %v826, %v570
      %v845 = vsub.f32 %v830, %v729
      %v846 = vsub.f32 %v834, %v731
      %v847 = vsub.f32 %v822, %v574
      %v848 = vsub.f32 %v826, %v576
      %v849 = vsub.f32 %v830, %v735
      %v850 = vsub.f32 %v834, %v737
      %v851 = vsub.f32 %v822, %v580
      %v852 = vsub.f32 %v826, %v582
      %v853 = vsub.f32 %v830, %v741
      %v854 = vsub.f32 %v834, %v743
      %v855 = vsub.f32 %v822, %v586
      %v856 = vsub.f32 %v826, %v588
      %v857 = vsub.f32 %v830, %v747
      %v858 = vsub.f32 %v834, %v749
      %v859 = vsub.f32 %v822, %v592
      %v860 = vsub.f32 %v826, %v594
      %v861 = vsub.f32 %v830, %v753
      %v862 = vsub.f32 %v834, %v755
      %v863 = vsub.f32 %v822, %v598
      %v864 = vsub.f32 %v826, %v600
      %v865 = vsub.f32 %v830, %v759
      %v866 = vsub.f32 %v834, %v761
      %v867 = vsub.f32 %v822, %v604
      %v868 = vsub.f32 %v826, %v606
      %v869 = vsub.f32 %v830, %v765
      %v870 = vsub.f32 %v834, %v767
      %v871 = vsub.f32 %v822, %v610
      %v872 = vsub.f32 %v826, %v612
      %v873 = vsub.f32 %v830, %v771
      %v874 = vsub.f32 %v834, %v773
      %v875 = vsub.f32 %v822, %v616
      %v876 = vsub.f32 %v826, %v618
      %v877 = vsub.f32 %v830, %v777
      %v878 = vsub.f32 %v834, %v779
      %v879 = vsub.f32 %v822, %v622
      %v880 = vsub.f32 %v826, %v624
      %v881 = vsub.f32 %v830, %v783
      %v882 = vsub.f32 %v834, %v785
      %v883 = vsub.f32 %v822, %v628
      %v884 = vsub.f32 %v826, %v630
      %v885 = vsub.f32 %v830, %v789
      %v886 = vsub.f32 %v834, %v791
      %v887 = vsub.f32 %v822, %v634
      %v888 = vsub.f32 %v826, %v636
      %v889 = vsub.f32 %v830, %v795
      %v890 = vsub.f32 %v834, %v797
      %v891 = vsub.f32 %v822, %v640
      %v892 = vsub.f32 %v826, %v642
      %v893 = vsub.f32 %v830, %v801
      %v894 = vsub.f32 %v834, %v803
      %v895 = vsub.f32 %v822, %v646
      %v896 = vsub.f32 %v826, %v648
      %v897 = vsub.f32 %v830, %v807
      %v898 = vsub.f32 %v834, %v809
      %v899 = vsub.f32 %v822, %v652
      %v900 = vsub.f32 %v826, %v654
      %v901 = vsub.f32 %v830, %v813
      %v902 = vsub.f32 %v834, %v815
      %v903 = vmin.f32 %v839, %v840
      %v904 = vmin.f32 %v903, %v841
      %v905 = vmin.f32 %v904, %v842
      %906 = vmin.xlane.f32.xlu0 %v905
      %v907 = vpop.xlane.xlu0 %906
      %v908 = vmin.f32 %v843, %v844
      %v909 = vmin.f32 %v908, %v845
      %v910 = vmin.f32 %v909, %v846
      %911 = vmin.xlane.f32.xlu0 %v910
      %v912 = vpop.xlane.xlu0 %911
      %v913 = vmin.f32 %v847, %v848
      %v914 = vmin.f32 %v913, %v849
      %v915 = vmin.f32 %v914, %v850
      %916 = vmin.xlane.f32.xlu0 %v915
      %v917 = vpop.xlane.xlu0 %916
      %v918 = vmin.f32 %v851, %v852
      %v919 = vmin.f32 %v918, %v853
      %v920 = vmin.f32 %v919, %v854
      %921 = vmin.xlane.f32.xlu0 %v920
      %v922 = vpop.xlane.xlu0 %921
      %v923 = vmin.f32 %v855, %v856
      %v924 = vmin.f32 %v923, %v857
      %v925 = vmin.f32 %v924, %v858
      %926 = vmin.xlane.f32.xlu0 %v925
      %v927 = vpop.xlane.xlu0 %926
      %v928 = vmin.f32 %v859, %v860
      %v929 = vmin.f32 %v928, %v861
      %v930 = vmin.f32 %v929, %v862
      %931 = vmin.xlane.f32.xlu0 %v930
      %v932 = vpop.xlane.xlu0 %931
      %v933 = vmin.f32 %v863, %v864
      %v934 = vmin.f32 %v933, %v865
      %v935 = vmin.f32 %v934, %v866
      %936 = vmin.xlane.f32.xlu0 %v935
      %v937 = vpop.xlane.xlu0 %936
      %v938 = vmin.f32 %v867, %v868
      %v939 = vmin.f32 %v938, %v869
      %v940 = vmin.f32 %v939, %v870
      %941 = vmin.xlane.f32.xlu0 %v940
      %v942 = vpop.xlane.xlu0 %941
      %v943 = vmin.f32 %v871, %v872
      %v944 = vmin.f32 %v943, %v873
      %v945 = vmin.f32 %v944, %v874
      %946 = vmin.xlane.f32.xlu0 %v945
      %v947 = vpop.xlane.xlu0 %946
      %v948 = vmin.f32 %v875, %v876
      %v949 = vmin.f32 %v948, %v877
      %v950 = vmin.f32 %v949, %v878
      %951 = vmin.xlane.f32.xlu0 %v950
      %v952 = vpop.xlane.xlu0 %951
      %v953 = vmin.f32 %v879, %v880
      %v954 = vmin.f32 %v953, %v881
      %v955 = vmin.f32 %v954, %v882
      %956 = vmin.xlane.f32.xlu0 %v955
      %v957 = vpop.xlane.xlu0 %956
      %v958 = vmin.f32 %v883, %v884
      %v959 = vmin.f32 %v958, %v885
      %v960 = vmin.f32 %v959, %v886
      %961 = vmin.xlane.f32.xlu0 %v960
      %v962 = vpop.xlane.xlu0 %961
      %v963 = vmin.f32 %v887, %v888
      %v964 = vmin.f32 %v963, %v889
      %v965 = vmin.f32 %v964, %v890
      %966 = vmin.xlane.f32.xlu0 %v965
      %v967 = vpop.xlane.xlu0 %966
      %v968 = vmin.f32 %v891, %v892
      %v969 = vmin.f32 %v968, %v893
      %v970 = vmin.f32 %v969, %v894
      %971 = vmin.xlane.f32.xlu0 %v970
      %v972 = vpop.xlane.xlu0 %971
      %v973 = vmin.f32 %v895, %v896
      %v974 = vmin.f32 %v973, %v897
      %v975 = vmin.f32 %v974, %v898
      %976 = vmin.xlane.f32.xlu0 %v975
      %v977 = vpop.xlane.xlu0 %976
      %v978 = vmin.f32 %v899, %v900
      %v979 = vmin.f32 %v978, %v901
      %v980 = vmin.f32 %v979, %v902
      %981 = vmin.xlane.f32.xlu0 %v980
      %v982 = vpop.xlane.xlu0 %981
      %vm983 = vcmask 7168
      %984 = vst.msk [vmem:[%s172] sm:$0xff] %vm983, %v907
      %985 = vst.msk [vmem:[%s172 + $0x8] sm:$0xff] %vm983, %v912
      %986 = vst.msk [vmem:[%s172 + $0x10] sm:$0xff] %vm983, %v917
      %987 = vst.msk [vmem:[%s172 + $0x18] sm:$0xff] %vm983, %v922
      %988 = vst.msk [vmem:[%s172 + $0x20] sm:$0xff] %vm983, %v927
      %989 = vst.msk [vmem:[%s172 + $0x28] sm:$0xff] %vm983, %v932
      %990 = vst.msk [vmem:[%s172 + $0x30] sm:$0xff] %vm983, %v937
      %991 = vst.msk [vmem:[%s172 + $0x38] sm:$0xff] %vm983, %v942
      %992 = vst.msk [vmem:[%s172 + $0x40] sm:$0xff] %vm983, %v947
      %993 = vst.msk [vmem:[%s172 + $0x48] sm:$0xff] %vm983, %v952
      %994 = vst.msk [vmem:[%s172 + $0x50] sm:$0xff] %vm983, %v957
      %995 = vst.msk [vmem:[%s172 + $0x58] sm:$0xff] %vm983, %v962
      %996 = vst.msk [vmem:[%s172 + $0x60] sm:$0xff] %vm983, %v967
      %997 = vst.msk [vmem:[%s172 + $0x68] sm:$0xff] %vm983, %v972
      %998 = vst.msk [vmem:[%s172 + $0x70] sm:$0xff] %vm983, %v977
      %999 = vst.msk [vmem:[%s172 + $0x78] sm:$0xff] %vm983, %v982
      %s1000 = smul.u32 16, %s14
      %p1001 = scmp.lt.s32.totalorder %s1000, 31
      %s1002 = scalar_select %p1001, %s1000, 31
      %s1003 = smul.addr %s1002, 8
      %s1004 = scalar_lea.vmem %s3, %s1003
      // Predicated region
      $region33: #{tpu_custom_call.1} parent=31 // pred_check
        %p1005 = pneg %p100
      $region34: #{tpu_custom_call.1} parent=31 // pred_check_branch
        %1007 = sbr.rel (%p1005) target = $region36
      $region35: #{tpu_custom_call.1} parent=31 // pred_region
        %s1008 = smul.u32 16, %s14
      $region36: #{tpu_custom_call.1} parent=31 // pred_fallthru
        _
    $region32: #{tpu_custom_call.1} parent=5 // pred_fallthru
      _
    %p1009 = scmp.le.s32.totalorder 2, %s9
    // Predicated region
    $region37: #{tpu_custom_call.1} parent=5 // pred_check
      %p1010 = pneg %p1009
    $region38: #{tpu_custom_call.1} parent=5 // pred_check_branch
      %1012 = sbr.rel (%p1010) target = $region40
    $region39: #{tpu_custom_call.1} parent=5 // pred_region
      %s1013 = ssub.s32 %s9, 2
      // Predicated region
      $region41: #{tpu_custom_call.1} parent=39 // pred_check
        %p1014 = pneg %p106
      $region42: #{tpu_custom_call.1} parent=39 // pred_check_branch
        %1016 = sbr.rel (%p1014) target = $region44
      $region43: #{tpu_custom_call.1} parent=39 // pred_region
        %s1017 = smul.u32 16, %s15
        %p1018 = scmp.lt.s32.totalorder %s1017, 31
        %s1019 = scalar_select %p1018, %s1017, 31
        %s1020 = smul.addr %s1019, 8
        %s1021 = scalar_lea.vmem %s3, %s1020
      $region44: #{tpu_custom_call.1} parent=39 // pred_fallthru
        _
    $region40: #{tpu_custom_call.1} parent=5 // pred_fallthru
      _
  $region6: #{tpu_custom_call.1} parent=0 // loop_footer
    %s13 = sadd.s32 1, %s9
  $region7: #{tpu_custom_call.1} parent=0 // loop_footer_branch
    %8 = sbr.rel target = $region3
  $region8: #{tpu_custom_call.1} parent=0 // loop_exit
    _

</llo_original>
